<compile_context>
chip_gen: v5e
topology: v5e:2x2
jax: 0.10.0
libtpu: 0.0.40
codegen_flags: <defaults>
</compile_context>

<pallas_src>
import functools
import math

import jax
import jax.numpy as jnp
from jax.experimental import pallas as pl
from jax.experimental.pallas import tpu as pltpu

LANE = 128                          # vreg lane width on every TPU generation
COLS = 4 * LANE                     # 512-wide last dim -> wide unmasked stores
_HARD_BLOCK_CAP = 8 * 1024 * 1024   # never exceed 8 MiB per block (v5e..v7x safe)


def _copy_kernel(x_ref, o_ref):
    # Pure element copy of the current tile (mem-bound; zero compute).
    o_ref[...] = x_ref[...]


def _cdiv(a, b):
    return -(-a // b)


def _vmem_capacity_bytes():
    try:
        return int(pltpu.get_tpu_info().vmem_capacity_bytes)
    except Exception:
        return 64 * 1024 * 1024     # conservative default (v7x per-TC VMEM)


def _plan_copy(total_elems, itemsize):
    """Pick a lane-dense, dtype-aware, VMEM-budget-aware block layout."""
    packing = max(1, 4 // itemsize)          # rows packed per 32-bit sublane
    sub = 8 * packing                        # 8 (f32) / 16 (bf16) / 32 (int8)
    unit_elems = sub * COLS                  # minimal legal (sub, 512) tile

    vmem = _vmem_capacity_bytes()
    # ~1/16 of VMEM per block leaves ample room for double-buffered in + out.
    block_budget_bytes = max(unit_elems * itemsize,
                             min(vmem // 16, _HARD_BLOCK_CAP))
    budget_units = max(1, block_budget_bytes // (unit_elems * itemsize))

    data_units = _cdiv(total_elems, unit_elems)
    # Prefer >= 2 grid programs when the data allows it (megacore on v7x).
    block_units = min(budget_units, max(1, _cdiv(data_units, 2)))

    block_elems = block_units * unit_elems
    padded_total = _cdiv(total_elems, block_elems) * block_elems
    tile_rows = block_units * sub
    rows = padded_total // COLS
    grid = rows // tile_rows
    block_bytes = block_elems * itemsize

    # Raise the scoped-VMEM limit enough for the double-buffered blocks, but
    # stay well under physical VMEM on every generation.
    vmem_limit = int(max(min(vmem // 2, 64 * 2 ** 20),
                         5 * block_bytes + (1 << 20)))
    vmem_limit = min(vmem_limit, vmem - (2 << 20))
    return rows, tile_rows, grid, padded_total, vmem_limit


@functools.partial(jax.jit, static_argnums=(1,))
def pallas_reshape(x, out_shape):
    """Equivalent of torch `x.view(-1, *out_shape)`; byte movement done in Pallas."""
    out_shape = tuple(int(d) for d in out_shape)
    total = int(x.size)
    out_elems = math.prod(out_shape)
    assert total % out_elems == 0, "input size not divisible by prod(out_shape)"
    lead = total // out_elems

    itemsize = jnp.dtype(x.dtype).itemsize
    rows, tile_rows, grid, padded_total, vmem_limit = _plan_copy(total, itemsize)

    x1d = x.reshape(-1)
    padded = padded_total != total
    if padded:
        x1d = jnp.pad(x1d, (0, padded_total - total))
    x2d = x1d.reshape(rows, COLS)

    call_kwargs = {}
    if padded:
        # Operand is a fresh intermediate inside this jit -> alias it into the
        # output so no second HBM allocation is made.
        call_kwargs["input_output_aliases"] = {0: 0}

    y2d = pl.pallas_call(
        _copy_kernel,
        out_shape=jax.ShapeDtypeStruct((rows, COLS), x.dtype),
        grid_spec=pltpu.PrefetchScalarGridSpec(
            num_scalar_prefetch=0,
            grid=(grid,),
            in_specs=[pl.BlockSpec((tile_rows, COLS), lambda i: (i, 0))],
            out_specs=pl.BlockSpec((tile_rows, COLS), lambda i: (i, 0)),
        ),
        compiler_params=pltpu.CompilerParams(
            dimension_semantics=("parallel",),
            vmem_limit_bytes=vmem_limit,
        ),
        **call_kwargs,
    )(x2d)

    y1d = y2d.reshape(-1)
    if padded:
        y1d = y1d[:total]
    return y1d.reshape((lead,) + out_shape)


if __name__ == "__main__":
    key = jax.random.PRNGKey(0)

    # Primary case (module spec): (batch=2, C=4, H=16, W=16) -> view(-1, 4, 256).
    x = jax.random.normal(key, (2, 4, 16, 16), dtype=jnp.float32)
    out_shape = (4, 256)

    y = jax.block_until_ready(pallas_reshape(x, out_shape))
    expected = x.reshape((-1,) + out_shape)
    assert y.shape == (2, 4, 256), y.shape
    assert y.dtype == x.dtype
    assert bool(jnp.array_equal(y, expected))

    # Secondary case: bf16 (16-row sublane packing), exactly tiled (no padding,
    # no aliasing), grid > 1 so the parallel axis can shard across v7x cores.
    x2 = jax.random.normal(jax.random.PRNGKey(1), (64, 4, 16, 16),
                           dtype=jnp.bfloat16)
    y2 = jax.block_until_ready(pallas_reshape(x2, (4, 256)))
    assert y2.shape == (64, 4, 256), y2.shape
    assert bool(jnp.array_equal(y2, x2.reshape((-1, 4, 256))))

    print("KERNEL_OK")
</pallas_src>

<mosaic_0001>
module attributes {stable_mosaic.version = 11 : i64} {
  func.func @_copy_kernel(%arg0: i32, %arg1: memref<8x512xf32, #tpu.memory_space<vmem>>, %arg2: memref<8x512xf32, #tpu.memory_space<vmem>>) attributes {dimension_semantics = [#tpu.dimension_semantics<parallel>], iteration_bounds = array<i64: 1>, scalar_prefetch = 0 : i64, scratch_operands = 0 : i64, tpu.core_type = #tpu.core_type<tc>, window_params = [{transform_indices = @transform_0, window_bounds = array<i64: 8, 512>}, {transform_indices = @transform_1, window_bounds = array<i64: 8, 512>}]} {
    %c0 = arith.constant 0 : index
    %c0_0 = arith.constant 0 : index
    %0 = vector.load %arg1[%c0, %c0_0] : memref<8x512xf32, #tpu.memory_space<vmem>>, vector<8x512xf32>
    %c0_1 = arith.constant 0 : index
    %c0_2 = arith.constant 0 : index
    %1 = vector.load %arg2[%c0_1, %c0_2] : memref<8x512xf32, #tpu.memory_space<vmem>>, vector<8x512xf32>
    tpu.vector_store %arg2[%c0_1, %c0_2], %0 {strides = array<i32>} : memref<8x512xf32, #tpu.memory_space<vmem>>, vector<8x512xf32>,
    return
  }
  func.func @transform_0(%arg0: i32) -> (i32, i32) {
    %c0_i32 = arith.constant 0 : i32
    %c0_i32_0 = arith.constant 0 : i32
    return %arg0, %c0_i32 : i32, i32
  }
  func.func @transform_1(%arg0: i32) -> (i32, i32) {
    %c0_i32 = arith.constant 0 : i32
    %c0_i32_0 = arith.constant 0 : i32
    return %arg0, %c0_i32 : i32, i32
  }
}

</mosaic_0001>

<llo_original>
// kernel: pallas_reshape.1
$region0: #{pallas_reshape.1}
  #allocation0 [shape = 'u32[]', space=smem, size = 0x4, offset = 0x4, fixed_abs, tag = 'smem constant byte address 0x4 - core index']
  #allocation1 [shape = 'u32[72,128]{1,0:T(1,128)}', space=vmem, size = 0x9000, scoped, tag = 'internal scratch']
  %s0 = inlined_call_operand.vmem [shape: f32[8,512], index: 0, kind: input, shape index: {}, may-alias: {0,1}]
  %s1 = inlined_call_operand.vmem [shape: f32[8,512], index: 1, kind: output, shape index: {}, may-alias: {0,1}]
  %s2 = sld [smem:[#allocation0]]
  $region14: #{pallas_reshape.1} parent=0
    _
  %s4 = ssub.s32 1, %s2
  %s5 = scalar_select 0, %s4, %s2
  // Predicated region
  $region2: #{pallas_reshape.1} parent=0 // pred_check
    _
  $region3: #{pallas_reshape.1} parent=0 // pred_check_branch
    %7 = sbr.rel (0) target = $region5
  $region4: #{pallas_reshape.1} parent=0 // pred_region
    _
  $region5: #{pallas_reshape.1} parent=0 // pred_fallthru
    _
  %v8 = vld [vmem:[%s0] sm:$0xff]
  %v9 = vld [vmem:[%s0 + $0x8] sm:$0xff]
  %v10 = vld [vmem:[%s0 + $0x10] sm:$0xff]
  %v11 = vld [vmem:[%s0 + $0x18] sm:$0xff]
  %12 = vst [vmem:[%s1] sm:$0xff] %v8
  %13 = vst [vmem:[%s1 + $0x8] sm:$0xff] %v9
  %14 = vst [vmem:[%s1 + $0x10] sm:$0xff] %v10
  %15 = vst [vmem:[%s1 + $0x18] sm:$0xff] %v11
  // Predicated region
  $region6: #{pallas_reshape.1} parent=0 // pred_check
    _
  $region7: #{pallas_reshape.1} parent=0 // pred_check_branch
    %17 = sbr.rel (0) target = $region9
  $region8: #{pallas_reshape.1} parent=0 // pred_region
    _
  $region9: #{pallas_reshape.1} parent=0 // pred_fallthru
    _
  // Predicated region
  $region10: #{pallas_reshape.1} parent=0 // pred_check
    _
  $region11: #{pallas_reshape.1} parent=0 // pred_check_branch
    %19 = sbr.rel (0) target = $region13
  $region12: #{pallas_reshape.1} parent=0 // pred_region
    _
  $region13: #{pallas_reshape.1} parent=0 // pred_fallthru
    _

</llo_original>
